<compile_context>
chip_gen: v5e
topology: v5e:2x2
jax: 0.10.0
libtpu: 0.0.40
codegen_flags: <defaults>
</compile_context>

<pallas_src>
import numpy as np
import jax
import jax.numpy as jnp
from jax.experimental import pallas as pl
from jax.experimental.pallas import tpu as pltpu

LANE = 128    # lane width == width of the wide hidden layers
ALIGN = 16    # row alignment for bf16 tiles (bf16 packs 2 rows / sublane)


def _round_up(x, m):
    return (x + m - 1) // m * m


def init_discriminator_params(key, state_dim, action_dim):
    """PyTorch nn.Linear default init: U(-1/sqrt(fan_in), 1/sqrt(fan_in)).
    Weights stored as (in_features, out_features); biases as (out_features,)."""
    dims = [state_dim + action_dim, 128, 128, 128, 32, 32, 1]
    params = []
    for i in range(len(dims) - 1):
        fan_in, fan_out = dims[i], dims[i + 1]
        key, kw, kb = jax.random.split(key, 3)
        bound = 1.0 / float(np.sqrt(fan_in))
        w = jax.random.uniform(kw, (fan_in, fan_out), jnp.float32, -bound, bound)
        b = jax.random.uniform(kb, (fan_out,), jnp.float32, -bound, bound)
        params.append((w, b))
    return params


def _compute_offsets(state_dim, action_dim):
    """Row offsets of each (lane-padded, 16-row-aligned) block in the packed slab."""
    offs = {}
    cur = 0
    offs["w1s"] = cur; cur += _round_up(state_dim, ALIGN)
    offs["w1a"] = cur; cur += _round_up(action_dim, ALIGN)
    offs["b1"] = cur; cur += ALIGN
    for layer in (2, 3, 4, 5):
        offs[f"w{layer}"] = cur; cur += LANE
        offs[f"b{layer}"] = cur; cur += ALIGN
    offs["w6"] = cur; cur += ALIGN     # W6^T stored as a single lane row
    offs["b6"] = cur; cur += ALIGN     # b6 broadcast across all 128 lanes
    return offs, cur


def _pack_params(params, state_dim, action_dim, offs, n_rows):
    """Pack the whole MLP into one (n_rows, 128) bf16 slab (single DMA).
    Narrow (32-wide) layers are zero-padded to 128 lanes so every hidden
    activation stays a full lane-dense tile; zero padding is exactly neutral."""
    slab = np.zeros((n_rows, LANE), np.float32)
    (w1, b1), (w2, b2), (w3, b3), (w4, b4), (w5, b5), (w6, b6) = [
        (np.asarray(w, np.float32), np.asarray(b, np.float32)) for (w, b) in params
    ]
    S, A = state_dim, action_dim
    slab[offs["w1s"]:offs["w1s"] + S, :] = w1[:S, :]      # (S, 128)
    slab[offs["w1a"]:offs["w1a"] + A, :] = w1[S:, :]      # (A, 128)
    slab[offs["b1"], :] = b1
    slab[offs["w2"]:offs["w2"] + 128, :] = w2
    slab[offs["b2"], :] = b2
    slab[offs["w3"]:offs["w3"] + 128, :] = w3
    slab[offs["b3"], :] = b3
    slab[offs["w4"]:offs["w4"] + 128, :32] = w4           # (128, 32) -> pad lanes
    slab[offs["b4"], :32] = b4
    slab[offs["w5"]:offs["w5"] + 32, :32] = w5            # (32, 32)  -> pad both
    slab[offs["b5"], :32] = b5
    slab[offs["w6"], :32] = w6[:, 0]                      # W6^T as one lane row
    slab[offs["b6"], :] = b6[0]                           # bias broadcast to lanes
    return jnp.asarray(slab, dtype=jnp.bfloat16)


def _pick_batch_tile(Bp, block_b):
    """Choose (bt, Bp).  Prefers a bt that divides Bp (no pad copy) and keeps
    the grid >= 2 steps when possible so both v7x TensorCores get work."""
    bt_max = min(_round_up(block_b, ALIGN), Bp)
    if Bp >= 2 * ALIGN:                        # leave work for the 2nd TC (v7x)
        bt_max = min(bt_max, Bp // 2)
    bt_max = max(ALIGN, bt_max - bt_max % ALIGN)
    bt = ALIGN
    for cand in range(bt_max, ALIGN - 1, -ALIGN):
        if Bp % cand == 0:
            bt = cand
            break
    if bt * 8 < bt_max:                        # only tiny divisors exist -> pad
        bt = bt_max
        Bp = _round_up(Bp, bt)
    return bt, Bp


def _make_kernel(state_dim, action_dim, offs):
    S, A = state_dim, action_dim
    o_w1s, o_w1a, o_b1 = offs["w1s"], offs["w1a"], offs["b1"]
    hidden = tuple((offs[f"w{l}"], offs[f"b{l}"]) for l in (2, 3, 4, 5))
    o_w6, o_b6 = offs["w6"], offs["b6"]
    f32, bf16 = jnp.float32, jnp.bfloat16

    def kernel(s_ref, a_ref, p_ref, o_ref):
        # Layer 1: in-kernel "concat" via two partial dots on the split W1
        # (bf16 operands, f32 accumulation on the MXU; bias/ReLU in f32).
        y = (jnp.dot(s_ref[...], p_ref[pl.ds(o_w1s, S), :],
                     preferred_element_type=f32)
             + jnp.dot(a_ref[...], p_ref[pl.ds(o_w1a, A), :],
                       preferred_element_type=f32)
             + p_ref[pl.ds(o_b1, 1), :].astype(f32))
        y = jnp.maximum(y, 0.0)

        # Layers 2-5: lane-padded (bt,128) tiles, bf16 dots, f32 elementwise.
        for (wo, bo) in hidden:
            y = (jnp.dot(y.astype(bf16), p_ref[pl.ds(wo, LANE), :],
                         preferred_element_type=f32)
                 + p_ref[pl.ds(bo, 1), :].astype(f32))
            y = jnp.maximum(y, 0.0)

        # Layer 6 (128 -> 1): only a 32x1 slice of a 128x128 matmul is real, so
        # do it on VPU + XLU instead of the MXU: elementwise mul with the
        # transposed weight row, lane-reduce, add the lane-broadcast bias.
        w6_row = p_ref[pl.ds(o_w6, 1), :].astype(f32)          # (1, 128)
        z = jnp.sum(y * w6_row, axis=-1, keepdims=True)        # (bt, 1)
        zb = z + p_ref[pl.ds(o_b6, 1), :].astype(f32)          # (bt, 128) lane-dense
        # Sigmoid via EUP exp + approximate EUP reciprocal (VPU only does adds).
        o_ref[...] = pl.reciprocal(1.0 + jnp.exp(-zb), approx=True)

    return kernel


class PallasDiscriminator:
    """InfoGAIL Discriminator forward pass on TPU via one fused Pallas kernel."""

    def __init__(self, state_dim, action_dim, params):
        self.state_dim = int(state_dim)
        self.action_dim = int(action_dim)
        self.offsets, self.n_rows = _compute_offsets(self.state_dim, self.action_dim)
        self.slab = _pack_params(params, self.state_dim, self.action_dim,
                                 self.offsets, self.n_rows)
        self._kernel = _make_kernel(self.state_dim, self.action_dim, self.offsets)

    def forward_batched(self, states, actions, *, block_b=512):
        """states: (B, state_dim), actions: (B, action_dim) -> (B, 1) scores."""
        assert states.ndim == 2 and actions.ndim == 2
        assert states.shape[0] == actions.shape[0]
        assert states.shape[1] == self.state_dim and actions.shape[1] == self.action_dim
        B = states.shape[0]
        Bp = _round_up(B, ALIGN)
        bt, Bp = _pick_batch_tile(Bp, block_b)

        states = states.astype(jnp.bfloat16)
        actions = actions.astype(jnp.bfloat16)
        if Bp != B:
            # Only taken for awkward batch sizes / the tiny single-sample path;
            # typical (power-of-two) batches go through with zero pad copy.
            states = jnp.pad(states, ((0, Bp - B), (0, 0)))
            actions = jnp.pad(actions, ((0, Bp - B), (0, 0)))

        out = pl.pallas_call(
            self._kernel,
            out_shape=jax.ShapeDtypeStruct((Bp, LANE), jnp.float32),
            grid=(Bp // bt,),
            in_specs=[
                pl.BlockSpec((bt, self.state_dim), lambda i: (i, 0)),
                pl.BlockSpec((bt, self.action_dim), lambda i: (i, 0)),
                # Constant block index -> bf16 weight slab stays VMEM-resident.
                pl.BlockSpec((self.n_rows, LANE), lambda i: (0, 0)),
            ],
            out_specs=pl.BlockSpec((bt, LANE), lambda i: (i, 0)),
            compiler_params=pltpu.CompilerParams(
                dimension_semantics=("parallel",)),
        )(states, actions, self.slab)
        # Every lane of the lane-dense output tile holds the score; take col 0.
        return out[:B, :1]

    def __call__(self, state, action):
        """PyTorch-equivalent forward: 1-D state & action -> (1,) sigmoid score."""
        out = self.forward_batched(state.reshape(1, -1), action.reshape(1, -1))
        return out.reshape(1)


def discriminator_forward_ref(state, action, params):
    """Pure-JAX reference (single sample, f32) for correctness checking."""
    y = jnp.concatenate([state, action], axis=0).astype(jnp.float32)[None, :]
    n = len(params)
    for i, (w, b) in enumerate(params):
        y = y @ w + b[None, :]
        if i < n - 1:
            y = jnp.maximum(y, 0.0)
    return (1.0 / (1.0 + jnp.exp(-y))).reshape(1)


def discriminator_forward_batched_ref(states, actions, params):
    """Pure-JAX reference (batched, f32)."""
    y = jnp.concatenate([states, actions], axis=1).astype(jnp.float32)
    n = len(params)
    for i, (w, b) in enumerate(params):
        y = y @ w + b[None, :]
        if i < n - 1:
            y = jnp.maximum(y, 0.0)
    return 1.0 / (1.0 + jnp.exp(-y))


if __name__ == "__main__":
    key = jax.random.PRNGKey(0)
    k_state, k_action, k_params, k_batch = jax.random.split(key, 4)

    state_dim, action_dim = 24, 8   # D = 32
    params = init_discriminator_params(k_params, state_dim, action_dim)
    disc = PallasDiscriminator(state_dim, action_dim, params)

    # Single-sample path (matches the PyTorch module's forward signature).
    state = jax.random.normal(k_state, (state_dim,), jnp.float32)
    action = jax.random.normal(k_action, (action_dim,), jnp.float32)
    out1 = jax.block_until_ready(disc(state, action))
    ref1 = discriminator_forward_ref(state, action, params)
    assert out1.shape == (1,)
    # bf16 matmul operands + approx reciprocal -> relaxed tolerance vs f32 ref.
    assert jnp.allclose(out1, ref1, atol=2e-2, rtol=2e-2), (out1, ref1)

    # Batched path (the performance path): B samples per call, grid over batch.
    B = 256
    ks, ka = jax.random.split(k_batch)
    states = jax.random.normal(ks, (B, state_dim), jnp.float32)
    actions = jax.random.normal(ka, (B, action_dim), jnp.float32)
    outB = jax.block_until_ready(disc.forward_batched(states, actions))
    refB = discriminator_forward_batched_ref(states, actions, params)
    assert outB.shape == (B, 1)
    assert jnp.allclose(outB, refB, atol=2e-2, rtol=2e-2), \
        float(jnp.max(jnp.abs(outB - refB)))

    print("KERNEL_OK")
</pallas_src>

<mosaic_0001>
module attributes {stable_mosaic.version = 11 : i64} {
  func.func @kernel(%arg0: i32, %arg1: memref<16x24xbf16, #tpu.memory_space<vmem>>, %arg2: memref<16x8xbf16, #tpu.memory_space<vmem>>, %arg3: memref<672x128xbf16, #tpu.memory_space<vmem>>, %arg4: memref<16x128xf32, #tpu.memory_space<vmem>>) attributes {dimension_semantics = [#tpu.dimension_semantics<parallel>], iteration_bounds = array<i64: 1>, scalar_prefetch = 0 : i64, scratch_operands = 0 : i64, tpu.core_type = #tpu.core_type<tc>, window_params = [{transform_indices = @transform_0, window_bounds = array<i64: 16, 24>}, {transform_indices = @transform_1, window_bounds = array<i64: 16, 8>}, {pipeline_mode = #tpu.pipeline_mode<synchronous>, transform_indices = @transform_2, window_bounds = array<i64: 672, 128>}, {transform_indices = @transform_3, window_bounds = array<i64: 16, 128>}]} {
    %c0 = arith.constant 0 : index
    %c0_0 = arith.constant 0 : index
    %0 = vector.load %arg1[%c0, %c0_0] : memref<16x24xbf16, #tpu.memory_space<vmem>>, vector<16x24xbf16>
    %c0_1 = arith.constant 0 : index
    %c0_2 = arith.constant 0 : index
    %1 = vector.load %arg3[%c0_1, %c0_2] : memref<672x128xbf16, #tpu.memory_space<vmem>>, vector<24x128xbf16>
    %cst = arith.constant dense<0.000000e+00> : vector<16x128xf32>
    %2 = tpu.matmul %0, %1, %cst {dimension_numbers = #tpu.dot_dimension_numbers<[1], [0], [0], [1], [0, 0, 1, 1], [], []>} : vector<16x24xbf16>, vector<24x128xbf16>, vector<16x128xf32> -> vector<16x128xf32>
    %c0_3 = arith.constant 0 : index
    %c0_4 = arith.constant 0 : index
    %3 = vector.load %arg2[%c0_3, %c0_4] : memref<16x8xbf16, #tpu.memory_space<vmem>>, vector<16x8xbf16>
    %c32 = arith.constant 32 : index
    %c0_5 = arith.constant 0 : index
    %4 = vector.load %arg3[%c32, %c0_5] : memref<672x128xbf16, #tpu.memory_space<vmem>>, vector<8x128xbf16>
    %cst_6 = arith.constant dense<0.000000e+00> : vector<16x128xf32>
    %5 = tpu.matmul %3, %4, %cst_6 {dimension_numbers = #tpu.dot_dimension_numbers<[1], [0], [0], [1], [0, 0, 1, 1], [], []>} : vector<16x8xbf16>, vector<8x128xbf16>, vector<16x128xf32> -> vector<16x128xf32>
    %6 = arith.addf %2, %5 : vector<16x128xf32>
    %c48 = arith.constant 48 : index
    %c0_7 = arith.constant 0 : index
    %7 = vector.load %arg3[%c48, %c0_7] : memref<672x128xbf16, #tpu.memory_space<vmem>>, vector<1x128xbf16>
    %8 = arith.extf %7 : vector<1x128xbf16> to vector<1x128xf32>
    %9 = vector.broadcast %8 : vector<1x128xf32> to vector<16x128xf32>
    %10 = arith.addf %6, %9 : vector<16x128xf32>
    %cst_8 = arith.constant 0.000000e+00 : f32
    %11 = vector.broadcast %cst_8 : f32 to vector<16x128xf32>
    %12 = arith.maximumf %10, %11 : vector<16x128xf32>
    %13 = arith.truncf %12 : vector<16x128xf32> to vector<16x128xbf16>
    %c64 = arith.constant 64 : index
    %c0_9 = arith.constant 0 : index
    %14 = vector.load %arg3[%c64, %c0_9] : memref<672x128xbf16, #tpu.memory_space<vmem>>, vector<128x128xbf16>
    %cst_10 = arith.constant dense<0.000000e+00> : vector<16x128xf32>
    %15 = tpu.matmul %13, %14, %cst_10 {dimension_numbers = #tpu.dot_dimension_numbers<[1], [0], [0], [1], [0, 0, 1, 1], [], []>} : vector<16x128xbf16>, vector<128x128xbf16>, vector<16x128xf32> -> vector<16x128xf32>
    %c192 = arith.constant 192 : index
    %c0_11 = arith.constant 0 : index
    %16 = vector.load %arg3[%c192, %c0_11] : memref<672x128xbf16, #tpu.memory_space<vmem>>, vector<1x128xbf16>
    %17 = arith.extf %16 : vector<1x128xbf16> to vector<1x128xf32>
    %18 = vector.broadcast %17 : vector<1x128xf32> to vector<16x128xf32>
    %19 = arith.addf %15, %18 : vector<16x128xf32>
    %cst_12 = arith.constant 0.000000e+00 : f32
    %20 = vector.broadcast %cst_12 : f32 to vector<16x128xf32>
    %21 = arith.maximumf %19, %20 : vector<16x128xf32>
    %22 = arith.truncf %21 : vector<16x128xf32> to vector<16x128xbf16>
    %c208 = arith.constant 208 : index
    %c0_13 = arith.constant 0 : index
    %23 = vector.load %arg3[%c208, %c0_13] : memref<672x128xbf16, #tpu.memory_space<vmem>>, vector<128x128xbf16>
    %cst_14 = arith.constant dense<0.000000e+00> : vector<16x128xf32>
    %24 = tpu.matmul %22, %23, %cst_14 {dimension_numbers = #tpu.dot_dimension_numbers<[1], [0], [0], [1], [0, 0, 1, 1], [], []>} : vector<16x128xbf16>, vector<128x128xbf16>, vector<16x128xf32> -> vector<16x128xf32>
    %c336 = arith.constant 336 : index
    %c0_15 = arith.constant 0 : index
    %25 = vector.load %arg3[%c336, %c0_15] : memref<672x128xbf16, #tpu.memory_space<vmem>>, vector<1x128xbf16>
    %26 = arith.extf %25 : vector<1x128xbf16> to vector<1x128xf32>
    %27 = vector.broadcast %26 : vector<1x128xf32> to vector<16x128xf32>
    %28 = arith.addf %24, %27 : vector<16x128xf32>
    %cst_16 = arith.constant 0.000000e+00 : f32
    %29 = vector.broadcast %cst_16 : f32 to vector<16x128xf32>
    %30 = arith.maximumf %28, %29 : vector<16x128xf32>
    %31 = arith.truncf %30 : vector<16x128xf32> to vector<16x128xbf16>
    %c352 = arith.constant 352 : index
    %c0_17 = arith.constant 0 : index
    %32 = vector.load %arg3[%c352, %c0_17] : memref<672x128xbf16, #tpu.memory_space<vmem>>, vector<128x128xbf16>
    %cst_18 = arith.constant dense<0.000000e+00> : vector<16x128xf32>
    %33 = tpu.matmul %31, %32, %cst_18 {dimension_numbers = #tpu.dot_dimension_numbers<[1], [0], [0], [1], [0, 0, 1, 1], [], []>} : vector<16x128xbf16>, vector<128x128xbf16>, vector<16x128xf32> -> vector<16x128xf32>
    %c480 = arith.constant 480 : index
    %c0_19 = arith.constant 0 : index
    %34 = vector.load %arg3[%c480, %c0_19] : memref<672x128xbf16, #tpu.memory_space<vmem>>, vector<1x128xbf16>
    %35 = arith.extf %34 : vector<1x128xbf16> to vector<1x128xf32>
    %36 = vector.broadcast %35 : vector<1x128xf32> to vector<16x128xf32>
    %37 = arith.addf %33, %36 : vector<16x128xf32>
    %cst_20 = arith.constant 0.000000e+00 : f32
    %38 = vector.broadcast %cst_20 : f32 to vector<16x128xf32>
    %39 = arith.maximumf %37, %38 : vector<16x128xf32>
    %40 = arith.truncf %39 : vector<16x128xf32> to vector<16x128xbf16>
    %c496 = arith.constant 496 : index
    %c0_21 = arith.constant 0 : index
    %41 = vector.load %arg3[%c496, %c0_21] : memref<672x128xbf16, #tpu.memory_space<vmem>>, vector<128x128xbf16>
    %cst_22 = arith.constant dense<0.000000e+00> : vector<16x128xf32>
    %42 = tpu.matmul %40, %41, %cst_22 {dimension_numbers = #tpu.dot_dimension_numbers<[1], [0], [0], [1], [0, 0, 1, 1], [], []>} : vector<16x128xbf16>, vector<128x128xbf16>, vector<16x128xf32> -> vector<16x128xf32>
    %c624 = arith.constant 624 : index
    %c0_23 = arith.constant 0 : index
    %43 = vector.load %arg3[%c624, %c0_23] : memref<672x128xbf16, #tpu.memory_space<vmem>>, vector<1x128xbf16>
    %44 = arith.extf %43 : vector<1x128xbf16> to vector<1x128xf32>
    %45 = vector.broadcast %44 : vector<1x128xf32> to vector<16x128xf32>
    %46 = arith.addf %42, %45 : vector<16x128xf32>
    %cst_24 = arith.constant 0.000000e+00 : f32
    %47 = vector.broadcast %cst_24 : f32 to vector<16x128xf32>
    %48 = arith.maximumf %46, %47 : vector<16x128xf32>
    %c640 = arith.constant 640 : index
    %c0_25 = arith.constant 0 : index
    %49 = vector.load %arg3[%c640, %c0_25] : memref<672x128xbf16, #tpu.memory_space<vmem>>, vector<1x128xbf16>
    %50 = arith.extf %49 : vector<1x128xbf16> to vector<1x128xf32>
    %51 = vector.broadcast %50 : vector<1x128xf32> to vector<16x128xf32>
    %52 = arith.mulf %48, %51 : vector<16x128xf32>
    %cst_26 = arith.constant dense<0.000000e+00> : vector<16xf32>
    %53 = vector.multi_reduction <add>, %52, %cst_26 [1] : vector<16x128xf32> to vector<16xf32>
    %54 = vector.shape_cast %53 : vector<16xf32> to vector<16x1xf32>
    %c656 = arith.constant 656 : index
    %c0_27 = arith.constant 0 : index
    %55 = vector.load %arg3[%c656, %c0_27] : memref<672x128xbf16, #tpu.memory_space<vmem>>, vector<1x128xbf16>
    %56 = arith.extf %55 : vector<1x128xbf16> to vector<1x128xf32>
    %57 = vector.broadcast %54 : vector<16x1xf32> to vector<16x128xf32>
    %58 = vector.broadcast %56 : vector<1x128xf32> to vector<16x128xf32>
    %59 = arith.addf %57, %58 : vector<16x128xf32>
    %cst_28 = arith.constant 0.000000e+00 : f32
    %60 = vector.broadcast %cst_28 : f32 to vector<16x128xf32>
    %61 = arith.subf %60, %59 : vector<16x128xf32>
    %62 = math.exp %61 : vector<16x128xf32>
    %cst_29 = arith.constant 1.000000e+00 : f32
    %63 = vector.broadcast %cst_29 : f32 to vector<16x128xf32>
    %64 = arith.addf %63, %62 : vector<16x128xf32>
    %65 = tpu.reciprocal %64 {approx = true} : vector<16x128xf32> -> vector<16x128xf32>
    %c0_30 = arith.constant 0 : index
    %c0_31 = arith.constant 0 : index
    %66 = vector.load %arg4[%c0_30, %c0_31] : memref<16x128xf32, #tpu.memory_space<vmem>>, vector<16x128xf32>
    tpu.vector_store %arg4[%c0_30, %c0_31], %65 {strides = array<i32>} : memref<16x128xf32, #tpu.memory_space<vmem>>, vector<16x128xf32>,
    return
  }
  func.func @transform_0(%arg0: i32) -> (i32, i32) {
    %c0_i32 = arith.constant 0 : i32
    %c0_i32_0 = arith.constant 0 : i32
    return %arg0, %c0_i32 : i32, i32
  }
  func.func @transform_1(%arg0: i32) -> (i32, i32) {
    %c0_i32 = arith.constant 0 : i32
    %c0_i32_0 = arith.constant 0 : i32
    return %arg0, %c0_i32 : i32, i32
  }
  func.func @transform_2(%arg0: i32) -> (i32, i32) {
    %c0_i32 = arith.constant 0 : i32
    %c0_i32_0 = arith.constant 0 : i32
    %c0_i32_1 = arith.constant 0 : i32
    return %c0_i32, %c0_i32_0 : i32, i32
  }
  func.func @transform_3(%arg0: i32) -> (i32, i32) {
    %c0_i32 = arith.constant 0 : i32
    %c0_i32_0 = arith.constant 0 : i32
    return %arg0, %c0_i32 : i32, i32
  }
}

</mosaic_0001>

<llo_original>
// kernel: tpu_custom_call.1
$region0: #{tpu_custom_call.1}
  #allocation0 [shape = 'u32[]', space=smem, size = 0x4, offset = 0x4, fixed_abs, tag = 'smem constant byte address 0x4 - core index']
  #allocation1 [shape = 'u32[72,128]{1,0:T(1,128)}', space=vmem, size = 0x9000, scoped, tag = 'internal scratch']
  %s0 = inlined_call_operand.vmem [shape: bf16[16,24], index: 0, kind: input, shape index: {}]
  %s1 = inlined_call_operand.vmem [shape: bf16[16,8], index: 1, kind: input, shape index: {}]
  %s2 = inlined_call_operand.hbm [shape: bf16[672,128], index: 2, kind: input, shape index: {}]
  %s3 = inlined_call_operand.hbm [shape: f32[16,128], index: 3, kind: output, shape index: {}]
  %s4 = sld [smem:[#allocation0]]
  $region26: #{tpu_custom_call.1} parent=0
    _
  %s6 = ssub.s32 1, %s4
  %s7 = scalar_select 0, %s6, %s4
  $region1: #{tpu_custom_call.1} parent=0
    #allocation2 [shape = 'u8[172032]{0}', space=vmem, size = 0x2a000, scoped, tag = 'input window, operand 2, single buffered']
    #allocation3 [shape = 's32[1]{0}', space=sflag, size = 0x4, scoped, tag = 'scoped memory for tpu_custom_call.1']
    #allocation4 [shape = 's32[1]{0}', space=sflag, size = 0x4, scoped, tag = 'scoped memory for tpu_custom_call.1']
    #allocation5 [shape = 'u8[8192]{0}', space=vmem, size = 0x2000, scoped, tag = 'output window, operand 0, single buffered']
    %8 = vsyncpa [#allocation3], 0
    %9 = vsyncpa [#allocation4], 0
    // Predicated region
    $region2: #{tpu_custom_call.1} parent=1 // pred_check
      _
    $region3: #{tpu_custom_call.1} parent=1 // pred_check_branch
      %11 = sbr.rel (0) target = $region5
    $region4: #{tpu_custom_call.1} parent=1 // pred_region
      _
    $region5: #{tpu_custom_call.1} parent=1 // pred_fallthru
      _
    // Predicated region
    $region6: #{tpu_custom_call.1} parent=1 // pred_check
      _
    $region7: #{tpu_custom_call.1} parent=1 // pred_check_branch
      %13 = sbr.rel (0) target = $region9
    $region8: #{tpu_custom_call.1} parent=1 // pred_region
      _
    $region9: #{tpu_custom_call.1} parent=1 // pred_fallthru
      _
    // Predicated region
    $region10: #{tpu_custom_call.1} parent=1 // pred_check
      _
    $region11: #{tpu_custom_call.1} parent=1 // pred_check_branch
      %15 = sbr.rel (0) target = $region13
    $region12: #{tpu_custom_call.1} parent=1 // pred_region
      %17 = vsyncadd [#allocation3], 0
      %s18 = sshll.u32 %s2, 4
      %s19 = int_to_ptr.hbm [resolvable:$true] %s18
      %s20 = sshll.u32 [#allocation2], 4
      %s21 = int_to_ptr.vmem [resolvable:$true] %s20
      %26 = dma.hbm_to_vmem [thread:$0]  %s19, 5376, %s21, [#allocation3], 64, 64, 4
    $region13: #{tpu_custom_call.1} parent=1 // pred_fallthru
      _
    // Predicated region
    $region14: #{tpu_custom_call.1} parent=1 // pred_check
      _
    $region15: #{tpu_custom_call.1} parent=1 // pred_check_branch
      %28 = sbr.rel (0) target = $region17
    $region16: #{tpu_custom_call.1} parent=1 // pred_region
      %30 = dma.done [#allocation3], 5376
    $region17: #{tpu_custom_call.1} parent=1 // pred_fallthru
      _
    %v32 = vld [vmem:[%s0] sm:$0xf]
    %v33 = vld [vmem:[%s0 + $0x4] sm:$0xf]
    %v34 = vld [vmem:[#allocation2] sm:$0xf]
    %v35 = vld [vmem:[#allocation2 + $0x4] sm:$0xf]
    %v36 = vld [vmem:[#allocation2 + $0x8] sm:$0xf]
    %v37 = vld [vmem:[%s1] sm:$0xf]
    %v38 = vld [vmem:[%s1 + $0x4] sm:$0xf]
    %v39 = vld [vmem:[#allocation2 + $0x10] sm:$0xf]
    %v42 = vunpack.c.l.b16 %v37
    %v43 = vunpack.c.l.b16 %v38
    %v44 = vpack.c.b16 %v43, %v42
    %vm45 = vcmask 64512
    %v47 = vsel %vm45, %v44, 0
    %vm49 = vcmask 1043456
    %v51 = vsel %vm49, %v39, 0
    %53 = vmatpush.bf16.msra.mxu0 0
    %54 = vmatpush.bf16.msra.mxu0 0
    %55 = vmatpush.bf16.msra.mxu0 0
    %56 = vmatpush.bf16.msra.mxu0 0
    %57 = vmatpush.bf16.msra.mxu0 0
    %58 = vmatpush.bf16.msra.mxu0 0
    %59 = vmatpush.bf16.msra.mxu0 0
    %60 = vmatpush.bf16.msra.mxu0 %v51
    %61 = vmatmul.bf16.gmra.mxu0 %v47
    %v62 = vpop.f32.mrf.mxu0
    %v63 = vadd.f32 0.0, %v62
    %v64 = vpop.f32.mrf.mxu0
    %v65 = vadd.f32 0.0, %v64
    %66 = vdwg.mxu0
    %v69 = vunpack.c.l.b16 %v32
    %v70 = vunpack.c.l.b16 %v33
    %v71 = vpack.c.b16 %v70, %v69
    %v75 = vunpack.c.l.b16 %v34
    %v76 = vunpack.c.l.b16 %v35
    %v77 = vunpack.c.l.b16 %v36
    %v78 = vpack.c.b16 %v76, %v75
    %v79 = vpack.c.b16 %v77, %v77
    %vm81 = vcmask 195584
    %v83 = vsel %vm81, %v71, 0
    %v86 = vsel %vm49, %v79, 0
    %88 = vmatpush.bf16.msra.mxu0 0
    %89 = vmatpush.bf16.msra.mxu0 0
    %90 = vmatpush.bf16.msra.mxu0 0
    %91 = vmatpush.bf16.msra.mxu0 0
    %92 = vmatpush.bf16.msra.mxu0 0
    %93 = vmatpush.bf16.msra.mxu0 0
    %94 = vmatpush.bf16.msra.mxu0 %v86
    %95 = vmatpush.bf16.msra.mxu0 %v78
    %96 = vmatmul.bf16.gmra.mxu0 %v83
    %v97 = vpop.f32.mrf.mxu0
    %v98 = vadd.f32 %v63, %v97
    %v99 = vpop.f32.mrf.mxu0
    %v100 = vadd.f32 %v65, %v99
    %101 = vdwg.mxu0
    %v102 = vld [vmem:[#allocation2 + $0x18] sm:$0x1]
    %v103 = vunpack.c.l.bf16 %v102
    %v104 = vperm.slane %v103, 0
    %v105 = vadd.f32 %v98, %v104
    %v106 = vadd.f32 %v100, %v104
    %v107 = vmax.f32 %v105, 0.0
    %v108 = vmax.f32 %v106, 0.0
    %v109 = vpack.c.bf16 %v108, %v107
    %v110 = vld [vmem:[#allocation2 + $0x20] sm:$0xf]
    %v111 = vld [vmem:[#allocation2 + $0x24] sm:$0xf]
    %v112 = vld [vmem:[#allocation2 + $0x28] sm:$0xf]
    %v113 = vld [vmem:[#allocation2 + $0x2c] sm:$0xf]
    %v114 = vld [vmem:[#allocation2 + $0x30] sm:$0xf]
    %v115 = vld [vmem:[#allocation2 + $0x34] sm:$0xf]
    %v116 = vld [vmem:[#allocation2 + $0x38] sm:$0xf]
    %v117 = vld [vmem:[#allocation2 + $0x3c] sm:$0xf]
    %v118 = vld [vmem:[#allocation2 + $0x40] sm:$0xf]
    %v119 = vld [vmem:[#allocation2 + $0x44] sm:$0xf]
    %v120 = vld [vmem:[#allocation2 + $0x48] sm:$0xf]
    %v121 = vld [vmem:[#allocation2 + $0x4c] sm:$0xf]
    %v122 = vld [vmem:[#allocation2 + $0x50] sm:$0xf]
    %v123 = vld [vmem:[#allocation2 + $0x54] sm:$0xf]
    %v124 = vld [vmem:[#allocation2 + $0x58] sm:$0xf]
    %v125 = vld [vmem:[#allocation2 + $0x5c] sm:$0xf]
    %v126 = vld [vmem:[#allocation2 + $0x60] sm:$0x1]
    %v127 = vunpack.c.l.bf16 %v126
    %v128 = vperm.slane %v127, 0
    %v145 = vunpack.c.l.b16 %v110
    %v146 = vunpack.c.l.b16 %v111
    %v147 = vunpack.c.l.b16 %v112
    %v148 = vunpack.c.l.b16 %v113
    %v149 = vunpack.c.l.b16 %v114
    %v150 = vunpack.c.l.b16 %v115
    %v151 = vunpack.c.l.b16 %v116
    %v152 = vunpack.c.l.b16 %v117
    %v153 = vunpack.c.l.b16 %v118
    %v154 = vunpack.c.l.b16 %v119
    %v155 = vunpack.c.l.b16 %v120
    %v156 = vunpack.c.l.b16 %v121
    %v157 = vunpack.c.l.b16 %v122
    %v158 = vunpack.c.l.b16 %v123
    %v159 = vunpack.c.l.b16 %v124
    %v160 = vunpack.c.l.b16 %v125
    %v161 = vpack.c.b16 %v146, %v145
    %v162 = vpack.c.b16 %v148, %v147
    %v163 = vpack.c.b16 %v150, %v149
    %v164 = vpack.c.b16 %v152, %v151
    %v165 = vpack.c.b16 %v154, %v153
    %v166 = vpack.c.b16 %v156, %v155
    %v167 = vpack.c.b16 %v158, %v157
    %v168 = vpack.c.b16 %v160, %v159
    %177 = vmatpush.bf16.msra.mxu0 %v168
    %178 = vmatpush.bf16.msra.mxu0 %v167
    %179 = vmatpush.bf16.msra.mxu0 %v166
    %180 = vmatpush.bf16.msra.mxu0 %v165
    %181 = vmatpush.bf16.msra.mxu0 %v164
    %182 = vmatpush.bf16.msra.mxu0 %v163
    %183 = vmatpush.bf16.msra.mxu0 %v162
    %184 = vmatpush.bf16.msra.mxu0 %v161
    %185 = vmatmul.bf16.gmra.mxu0 %v109
    %v186 = vpop.f32.mrf.mxu0
    %v187 = vadd.f32 %v128, %v186
    %v188 = vpop.f32.mrf.mxu0
    %v189 = vadd.f32 %v128, %v188
    %190 = vdwg.mxu0
    %v191 = vmax.f32 %v187, 0.0
    %v192 = vmax.f32 %v189, 0.0
    %v193 = vpack.c.bf16 %v192, %v191
    %v194 = vld [vmem:[#allocation2 + $0x68] sm:$0xf]
    %v195 = vld [vmem:[#allocation2 + $0x6c] sm:$0xf]
    %v196 = vld [vmem:[#allocation2 + $0x70] sm:$0xf]
    %v197 = vld [vmem:[#allocation2 + $0x74] sm:$0xf]
    %v198 = vld [vmem:[#allocation2 + $0x78] sm:$0xf]
    %v199 = vld [vmem:[#allocation2 + $0x7c] sm:$0xf]
    %v200 = vld [vmem:[#allocation2 + $0x80] sm:$0xf]
    %v201 = vld [vmem:[#allocation2 + $0x84] sm:$0xf]
    %v202 = vld [vmem:[#allocation2 + $0x88] sm:$0xf]
    %v203 = vld [vmem:[#allocation2 + $0x8c] sm:$0xf]
    %v204 = vld [vmem:[#allocation2 + $0x90] sm:$0xf]
    %v205 = vld [vmem:[#allocation2 + $0x94] sm:$0xf]
    %v206 = vld [vmem:[#allocation2 + $0x98] sm:$0xf]
    %v207 = vld [vmem:[#allocation2 + $0x9c] sm:$0xf]
    %v208 = vld [vmem:[#allocation2 + $0xa0] sm:$0xf]
    %v209 = vld [vmem:[#allocation2 + $0xa4] sm:$0xf]
    %v210 = vld [vmem:[#allocation2 + $0xa8] sm:$0x1]
    %v211 = vunpack.c.l.bf16 %v210
    %v212 = vperm.slane %v211, 0
    %v229 = vunpack.c.l.b16 %v194
    %v230 = vunpack.c.l.b16 %v195
    %v231 = vunpack.c.l.b16 %v196
    %v232 = vunpack.c.l.b16 %v197
    %v233 = vunpack.c.l.b16 %v198
    %v234 = vunpack.c.l.b16 %v199
    %v235 = vunpack.c.l.b16 %v200
    %v236 = vunpack.c.l.b16 %v201
    %v237 = vunpack.c.l.b16 %v202
    %v238 = vunpack.c.l.b16 %v203
    %v239 = vunpack.c.l.b16 %v204
    %v240 = vunpack.c.l.b16 %v205
    %v241 = vunpack.c.l.b16 %v206
    %v242 = vunpack.c.l.b16 %v207
    %v243 = vunpack.c.l.b16 %v208
    %v244 = vunpack.c.l.b16 %v209
    %v245 = vpack.c.b16 %v230, %v229
    %v246 = vpack.c.b16 %v232, %v231
    %v247 = vpack.c.b16 %v234, %v233
    %v248 = vpack.c.b16 %v236, %v235
    %v249 = vpack.c.b16 %v238, %v237
    %v250 = vpack.c.b16 %v240, %v239
    %v251 = vpack.c.b16 %v242, %v241
    %v252 = vpack.c.b16 %v244, %v243
    %261 = vmatpush.bf16.msra.mxu0 %v252
    %262 = vmatpush.bf16.msra.mxu0 %v251
    %263 = vmatpush.bf16.msra.mxu0 %v250
    %264 = vmatpush.bf16.msra.mxu0 %v249
    %265 = vmatpush.bf16.msra.mxu0 %v248
    %266 = vmatpush.bf16.msra.mxu0 %v247
    %267 = vmatpush.bf16.msra.mxu0 %v246
    %268 = vmatpush.bf16.msra.mxu0 %v245
    %269 = vmatmul.bf16.gmra.mxu0 %v193
    %v270 = vpop.f32.mrf.mxu0
    %v271 = vadd.f32 %v212, %v270
    %v272 = vpop.f32.mrf.mxu0
    %v273 = vadd.f32 %v212, %v272
    %274 = vdwg.mxu0
    %v275 = vmax.f32 %v271, 0.0
    %v276 = vmax.f32 %v273, 0.0
    %v277 = vpack.c.bf16 %v276, %v275
    %v278 = vld [vmem:[#allocation2 + $0xb0] sm:$0xf]
    %v279 = vld [vmem:[#allocation2 + $0xb4] sm:$0xf]
    %v280 = vld [vmem:[#allocation2 + $0xb8] sm:$0xf]
    %v281 = vld [vmem:[#allocation2 + $0xbc] sm:$0xf]
    %v282 = vld [vmem:[#allocation2 + $0xc0] sm:$0xf]
    %v283 = vld [vmem:[#allocation2 + $0xc4] sm:$0xf]
    %v284 = vld [vmem:[#allocation2 + $0xc8] sm:$0xf]
    %v285 = vld [vmem:[#allocation2 + $0xcc] sm:$0xf]
    %v286 = vld [vmem:[#allocation2 + $0xd0] sm:$0xf]
    %v287 = vld [vmem:[#allocation2 + $0xd4] sm:$0xf]
    %v288 = vld [vmem:[#allocation2 + $0xd8] sm:$0xf]
    %v289 = vld [vmem:[#allocation2 + $0xdc] sm:$0xf]
    %v290 = vld [vmem:[#allocation2 + $0xe0] sm:$0xf]
    %v291 = vld [vmem:[#allocation2 + $0xe4] sm:$0xf]
    %v292 = vld [vmem:[#allocation2 + $0xe8] sm:$0xf]
    %v293 = vld [vmem:[#allocation2 + $0xec] sm:$0xf]
    %v294 = vld [vmem:[#allocation2 + $0xf0] sm:$0x1]
    %v295 = vunpack.c.l.bf16 %v294
    %v296 = vperm.slane %v295, 0
    %v313 = vunpack.c.l.b16 %v278
    %v314 = vunpack.c.l.b16 %v279
    %v315 = vunpack.c.l.b16 %v280
    %v316 = vunpack.c.l.b16 %v281
    %v317 = vunpack.c.l.b16 %v282
    %v318 = vunpack.c.l.b16 %v283
    %v319 = vunpack.c.l.b16 %v284
    %v320 = vunpack.c.l.b16 %v285
    %v321 = vunpack.c.l.b16 %v286
    %v322 = vunpack.c.l.b16 %v287
    %v323 = vunpack.c.l.b16 %v288
    %v324 = vunpack.c.l.b16 %v289
    %v325 = vunpack.c.l.b16 %v290
    %v326 = vunpack.c.l.b16 %v291
    %v327 = vunpack.c.l.b16 %v292
    %v328 = vunpack.c.l.b16 %v293
    %v329 = vpack.c.b16 %v314, %v313
    %v330 = vpack.c.b16 %v316, %v315
    %v331 = vpack.c.b16 %v318, %v317
    %v332 = vpack.c.b16 %v320, %v319
    %v333 = vpack.c.b16 %v322, %v321
    %v334 = vpack.c.b16 %v324, %v323
    %v335 = vpack.c.b16 %v326, %v325
    %v336 = vpack.c.b16 %v328, %v327
    %345 = vmatpush.bf16.msra.mxu0 %v336
    %346 = vmatpush.bf16.msra.mxu0 %v335
    %347 = vmatpush.bf16.msra.mxu0 %v334
    %348 = vmatpush.bf16.msra.mxu0 %v333
    %349 = vmatpush.bf16.msra.mxu0 %v332
    %350 = vmatpush.bf16.msra.mxu0 %v331
    %351 = vmatpush.bf16.msra.mxu0 %v330
    %352 = vmatpush.bf16.msra.mxu0 %v329
    %353 = vmatmul.bf16.gmra.mxu0 %v277
    %v354 = vpop.f32.mrf.mxu0
    %v355 = vadd.f32 %v296, %v354
    %v356 = vpop.f32.mrf.mxu0
    %v357 = vadd.f32 %v296, %v356
    %358 = vdwg.mxu0
    %v359 = vmax.f32 %v355, 0.0
    %v360 = vmax.f32 %v357, 0.0
    %v361 = vpack.c.bf16 %v360, %v359
    %v362 = vld [vmem:[#allocation2 + $0xf8] sm:$0xf]
    %v363 = vld [vmem:[#allocation2 + $0xfc] sm:$0xf]
    %v364 = vld [vmem:[#allocation2 + $0x100] sm:$0xf]
    %v365 = vld [vmem:[#allocation2 + $0x104] sm:$0xf]
    %v366 = vld [vmem:[#allocation2 + $0x108] sm:$0xf]
    %v367 = vld [vmem:[#allocation2 + $0x10c] sm:$0xf]
    %v368 = vld [vmem:[#allocation2 + $0x110] sm:$0xf]
    %v369 = vld [vmem:[#allocation2 + $0x114] sm:$0xf]
    %v370 = vld [vmem:[#allocation2 + $0x118] sm:$0xf]
    %v371 = vld [vmem:[#allocation2 + $0x11c] sm:$0xf]
    %v372 = vld [vmem:[#allocation2 + $0x120] sm:$0xf]
    %v373 = vld [vmem:[#allocation2 + $0x124] sm:$0xf]
    %v374 = vld [vmem:[#allocation2 + $0x128] sm:$0xf]
    %v375 = vld [vmem:[#allocation2 + $0x12c] sm:$0xf]
    %v376 = vld [vmem:[#allocation2 + $0x130] sm:$0xf]
    %v377 = vld [vmem:[#allocation2 + $0x134] sm:$0xf]
    %v378 = vld [vmem:[#allocation2 + $0x138] sm:$0x1]
    %v379 = vunpack.c.l.bf16 %v378
    %v380 = vperm.slane %v379, 0
    %v397 = vunpack.c.l.b16 %v362
    %v398 = vunpack.c.l.b16 %v363
    %v399 = vunpack.c.l.b16 %v364
    %v400 = vunpack.c.l.b16 %v365
    %v401 = vunpack.c.l.b16 %v366
    %v402 = vunpack.c.l.b16 %v367
    %v403 = vunpack.c.l.b16 %v368
    %v404 = vunpack.c.l.b16 %v369
    %v405 = vunpack.c.l.b16 %v370
    %v406 = vunpack.c.l.b16 %v371
    %v407 = vunpack.c.l.b16 %v372
    %v408 = vunpack.c.l.b16 %v373
    %v409 = vunpack.c.l.b16 %v374
    %v410 = vunpack.c.l.b16 %v375
    %v411 = vunpack.c.l.b16 %v376
    %v412 = vunpack.c.l.b16 %v377
    %v413 = vpack.c.b16 %v398, %v397
    %v414 = vpack.c.b16 %v400, %v399
    %v415 = vpack.c.b16 %v402, %v401
    %v416 = vpack.c.b16 %v404, %v403
    %v417 = vpack.c.b16 %v406, %v405
    %v418 = vpack.c.b16 %v408, %v407
    %v419 = vpack.c.b16 %v410, %v409
    %v420 = vpack.c.b16 %v412, %v411
    %429 = vmatpush.bf16.msra.mxu0 %v420
    %430 = vmatpush.bf16.msra.mxu0 %v419
    %431 = vmatpush.bf16.msra.mxu0 %v418
    %432 = vmatpush.bf16.msra.mxu0 %v417
    %433 = vmatpush.bf16.msra.mxu0 %v416
    %434 = vmatpush.bf16.msra.mxu0 %v415
    %435 = vmatpush.bf16.msra.mxu0 %v414
    %436 = vmatpush.bf16.msra.mxu0 %v413
    %437 = vmatmul.bf16.gmra.mxu0 %v361
    %v438 = vpop.f32.mrf.mxu0
    %v439 = vadd.f32 %v380, %v438
    %v440 = vpop.f32.mrf.mxu0
    %v441 = vadd.f32 %v380, %v440
    %442 = vdwg.mxu0
    %v443 = vmax.f32 %v439, 0.0
    %v444 = vmax.f32 %v441, 0.0
    %v445 = vld [vmem:[#allocation2 + $0x140] sm:$0x1]
    %v446 = vunpack.c.l.bf16 %v445
    %v447 = vperm.slane %v446, 0
    %v448 = vmul.f32 %v443, %v447
    %v449 = vmul.f32 %v444, %v447
    %450 = vadd.xlane.f32.xlu0 %v448
    %v451 = vpop.xlane.xlu0 %450
    %452 = vadd.xlane.f32.xlu0 %v449
    %v453 = vpop.xlane.xlu0 %452
    %v454 = vld [vmem:[#allocation2 + $0x148] sm:$0x1]
    %v455 = vunpack.c.l.bf16 %v454
    %v456 = vperm.slane %v455, 0
    %v457 = vadd.f32 %v451, %v456
    %v458 = vadd.f32 %v453, %v456
    %v459 = vsub.f32 0.0, %v457
    %v460 = vsub.f32 0.0, %v458
    %v461 = vmul.f32 %v459, 1.442695
    %v462 = vpow.pop %v461
    %v463 = vmul.f32 %v460, 1.442695
    %v464 = vpow.pop %v463
    %v465 = vadd.f32 %v462, 1.0
    %v466 = vadd.f32 %v464, 1.0
    %v467 = vrcp.pop %v465
    %v468 = vrcp.pop %v466
    %469 = vst [vmem:[#allocation5] sm:$0xff] %v467
    %470 = vst [vmem:[#allocation5 + $0x8] sm:$0xff] %v468
    // Predicated region
    $region18: #{tpu_custom_call.1} parent=1 // pred_check
      _
    $region19: #{tpu_custom_call.1} parent=1 // pred_check_branch
      %472 = sbr.rel (0) target = $region21
    $region20: #{tpu_custom_call.1} parent=1 // pred_region
      %474 = vsyncadd [#allocation4], 0
      %s475 = sshll.u32 [#allocation5], 4
      %s476 = int_to_ptr.vmem [resolvable:$true] %s475
      %s477 = sshll.u32 %s3, 4
      %s478 = int_to_ptr.hbm [resolvable:$true] %s477
      %483 = dma.vmem_to_hbm [thread:$0]  %s476, 256, %s478, [#allocation4], 128, 128, 8
    $region21: #{tpu_custom_call.1} parent=1 // pred_fallthru
      _
    // Predicated region
    $region22: #{tpu_custom_call.1} parent=1 // pred_check
      _
    $region23: #{tpu_custom_call.1} parent=1 // pred_check_branch
      %485 = sbr.rel (0) target = $region25
    $region24: #{tpu_custom_call.1} parent=1 // pred_region
      %487 = dma.done [#allocation4], 256
    $region25: #{tpu_custom_call.1} parent=1 // pred_fallthru
      _
    %488 = vsyncpa [#allocation3], 1
    %489 = vsyncpa [#allocation4], 1

</llo_original>
